<compile_context>
chip_gen: v7x
topology: tpu7x:2x2x1
jax: 0.10.0
libtpu: 0.0.40
codegen_flags: <defaults>
</compile_context>

<pallas_src>
import functools

import jax
import jax.numpy as jnp
import numpy as np
from jax.experimental import pallas as pl
from jax.experimental.pallas import tpu as pltpu

LOG_SIG_MIN = -20.0
LOG_SIG_MAX = 2.0


def _round_up(x, m):
    return ((x + m - 1) // m) * m


def _actor_kernel(x_ref,
                  w1_ref, b1_ref,
                  w2_ref, b2_ref,
                  wh_ref, bh_ref,
                  out_ref, *, n_action):
    x = x_ref[...]

    # fc1 + ReLU
    h1 = jnp.dot(x, w1_ref[...], preferred_element_type=jnp.float32) + b1_ref[...]
    h1 = jnp.maximum(h1, 0.0)

    # fc2 + ReLU
    h2 = jnp.dot(h1, w2_ref[...], preferred_element_type=jnp.float32) + b2_ref[...]
    h2 = jnp.maximum(h2, 0.0)

    # fused [mu | sigma | zero-pad] head: single MXU pass over the packed,
    # lane-padded weight.  Output width is a multiple of 128 -> unmasked vst.
    heads = jnp.dot(h2, wh_ref[...], preferred_element_type=jnp.float32) + bh_ref[...]

    # Clamp only the sigma lanes [n_action, 2*n_action); mu lanes pass through.
    # Padded lanes are zero (zero weight columns / bias) and clamping them to
    # [-20, 2] leaves them at zero, so a single ">= n_action" mask suffices.
    lane = jax.lax.broadcasted_iota(jnp.int32, heads.shape, dimension=1)
    clamped = jnp.clip(heads, LOG_SIG_MIN, LOG_SIG_MAX)
    out_ref[...] = jnp.where(lane >= n_action, clamped, heads)


def actor_forward(state, params):
    """Actor forward pass. Returns (mu, log_sigma_clamped)."""
    batch, input_dim = state.shape
    fc1_dim = params["w1"].shape[1]
    fc2_dim = params["w2"].shape[1]
    n_action = params["wmu"].shape[1]

    # Pack mu/sigma heads into one lane-dense weight / bias and pad the packed
    # width up to a multiple of 128 so the kernel's output slab is lane-dense.
    # (Cheap wrapper-side concatenate/pad; stored params stay PyTorch-shaped.)
    head_out = 2 * n_action
    head_pad = _round_up(head_out, 128)
    wh = jnp.concatenate([params["wmu"], params["wsig"]], axis=1)   # (fc2, 2A)
    bh = jnp.concatenate([params["bmu"], params["bsig"]], axis=1)   # (1, 2A)
    if head_pad != head_out:
        wh = jnp.pad(wh, ((0, 0), (0, head_pad - head_out)))
        bh = jnp.pad(bh, ((0, 0), (0, head_pad - head_out)))

    # Batch tiling: weights stay resident, state/output tiles are pipelined.
    tb = min(512, _round_up(batch, 8))
    padded_batch = _round_up(batch, tb)
    if padded_batch != batch:
        state = jnp.pad(state, ((0, padded_batch - batch), (0, 0)))
    grid = (padded_batch // tb,)

    resident = lambda i: (0, 0)   # weights / biases: same block every step
    tiled = lambda i: (i, 0)      # state / output: march over batch tiles

    flops = 2 * batch * (input_dim * fc1_dim
                         + fc1_dim * fc2_dim
                         + fc2_dim * head_pad)
    bytes_accessed = 4 * (padded_batch * input_dim
                          + input_dim * fc1_dim + fc1_dim
                          + fc1_dim * fc2_dim + fc2_dim
                          + fc2_dim * head_pad + head_pad
                          + padded_batch * head_pad)

    out = pl.pallas_call(
        functools.partial(_actor_kernel, n_action=n_action),
        out_shape=jax.ShapeDtypeStruct((padded_batch, head_pad), jnp.float32),
        grid=grid,
        in_specs=[
            pl.BlockSpec((tb, input_dim), tiled),
            pl.BlockSpec((input_dim, fc1_dim), resident),
            pl.BlockSpec((1, fc1_dim), resident),
            pl.BlockSpec((fc1_dim, fc2_dim), resident),
            pl.BlockSpec((1, fc2_dim), resident),
            pl.BlockSpec((fc2_dim, head_pad), resident),
            pl.BlockSpec((1, head_pad), resident),
        ],
        out_specs=pl.BlockSpec((tb, head_pad), tiled),
        compiler_params=pltpu.CompilerParams(
            dimension_semantics=("parallel",),
            vmem_limit_bytes=32 * 1024 * 1024,
        ),
        cost_estimate=pl.CostEstimate(
            flops=flops, transcendentals=0, bytes_accessed=bytes_accessed),
    )(state, params["w1"], params["b1"], params["w2"], params["b2"], wh, bh)

    out = out[:batch]
    mu = out[:, :n_action]
    sigma = out[:, n_action:head_out]
    return mu, sigma


def _xavier_uniform(key, fan_in, fan_out):
    # matches nn.init.xavier_uniform_(gain=1); stored as (in, out)
    limit = float(np.sqrt(6.0 / (fan_in + fan_out)))
    return jax.random.uniform(key, (fan_in, fan_out), jnp.float32, -limit, limit)


def init_actor_params(key, input_dim, fc1_dim, fc2_dim, n_action):
    k1, k2, k3, k4 = jax.random.split(key, 4)
    return {
        "w1": _xavier_uniform(k1, input_dim, fc1_dim),
        "b1": jnp.zeros((1, fc1_dim), jnp.float32),
        "w2": _xavier_uniform(k2, fc1_dim, fc2_dim),
        "b2": jnp.zeros((1, fc2_dim), jnp.float32),
        "wmu": _xavier_uniform(k3, fc2_dim, n_action),
        "bmu": jnp.zeros((1, n_action), jnp.float32),
        "wsig": _xavier_uniform(k4, fc2_dim, n_action),
        "bsig": jnp.zeros((1, n_action), jnp.float32),
    }


def actor_forward_ref(state, p):
    h1 = jnp.maximum(state @ p["w1"] + p["b1"], 0.0)
    h2 = jnp.maximum(h1 @ p["w2"] + p["b2"], 0.0)
    mu = h2 @ p["wmu"] + p["bmu"]
    sigma = jnp.clip(h2 @ p["wsig"] + p["bsig"], LOG_SIG_MIN, LOG_SIG_MAX)
    return mu, sigma


if __name__ == "__main__":
    # Small shapes consistent with the module's forward.
    batch, input_dim, fc1_dim, fc2_dim, n_action = 8, 16, 32, 32, 8

    key = jax.random.PRNGKey(0)
    k_params, k_state = jax.random.split(key)

    params = init_actor_params(k_params, input_dim, fc1_dim, fc2_dim, n_action)
    state = jax.random.normal(k_state, (batch, input_dim), jnp.float32)

    mu, sigma = jax.jit(actor_forward)(state, params)
    jax.block_until_ready((mu, sigma))

    mu_ref, sigma_ref = actor_forward_ref(state, params)
    np.testing.assert_allclose(np.asarray(mu), np.asarray(mu_ref), rtol=1e-5, atol=1e-5)
    np.testing.assert_allclose(np.asarray(sigma), np.asarray(sigma_ref), rtol=1e-5, atol=1e-5)

    print("KERNEL_OK")
</pallas_src>

<mosaic_0001>
module attributes {stable_mosaic.version = 11 : i64} {
  func.func @_actor_kernel(%arg0: i32, %arg1: memref<8x16xf32, #tpu.memory_space<vmem>>, %arg2: memref<16x32xf32, #tpu.memory_space<vmem>>, %arg3: memref<1x32xf32, #tpu.memory_space<vmem>>, %arg4: memref<32x32xf32, #tpu.memory_space<vmem>>, %arg5: memref<1x32xf32, #tpu.memory_space<vmem>>, %arg6: memref<32x128xf32, #tpu.memory_space<vmem>>, %arg7: memref<1x128xf32, #tpu.memory_space<vmem>>, %arg8: memref<8x128xf32, #tpu.memory_space<vmem>>) attributes {dimension_semantics = [#tpu.dimension_semantics<parallel>], iteration_bounds = array<i64: 1>, scalar_prefetch = 0 : i64, scratch_operands = 0 : i64, tpu.core_type = #tpu.core_type<tc>, window_params = [{transform_indices = @transform_0, window_bounds = array<i64: 8, 16>}, {pipeline_mode = #tpu.pipeline_mode<synchronous>, transform_indices = @transform_1, window_bounds = array<i64: 16, 32>}, {pipeline_mode = #tpu.pipeline_mode<synchronous>, transform_indices = @transform_2, window_bounds = array<i64: 1, 32>}, {pipeline_mode = #tpu.pipeline_mode<synchronous>, transform_indices = @transform_3, window_bounds = array<i64: 32, 32>}, {pipeline_mode = #tpu.pipeline_mode<synchronous>, transform_indices = @transform_4, window_bounds = array<i64: 1, 32>}, {pipeline_mode = #tpu.pipeline_mode<synchronous>, transform_indices = @transform_5, window_bounds = array<i64: 32, 128>}, {pipeline_mode = #tpu.pipeline_mode<synchronous>, transform_indices = @transform_6, window_bounds = array<i64: 1, 128>}, {transform_indices = @transform_7, window_bounds = array<i64: 8, 128>}]} {
    %c0 = arith.constant 0 : index
    %c0_0 = arith.constant 0 : index
    %0 = vector.load %arg1[%c0, %c0_0] : memref<8x16xf32, #tpu.memory_space<vmem>>, vector<8x16xf32>
    %c0_1 = arith.constant 0 : index
    %c0_2 = arith.constant 0 : index
    %1 = vector.load %arg2[%c0_1, %c0_2] : memref<16x32xf32, #tpu.memory_space<vmem>>, vector<16x32xf32>
    %cst = arith.constant dense<0.000000e+00> : vector<8x32xf32>
    %2 = tpu.matmul %0, %1, %cst {dimension_numbers = #tpu.dot_dimension_numbers<[1], [0], [0], [1], [0, 0, 1, 1], [], []>} : vector<8x16xf32>, vector<16x32xf32>, vector<8x32xf32> -> vector<8x32xf32>
    %c0_3 = arith.constant 0 : index
    %c0_4 = arith.constant 0 : index
    %3 = vector.load %arg3[%c0_3, %c0_4] : memref<1x32xf32, #tpu.memory_space<vmem>>, vector<1x32xf32>
    %4 = vector.broadcast %3 : vector<1x32xf32> to vector<8x32xf32>
    %5 = arith.addf %2, %4 : vector<8x32xf32>
    %cst_5 = arith.constant 0.000000e+00 : f32
    %6 = vector.broadcast %cst_5 : f32 to vector<8x32xf32>
    %7 = arith.maximumf %5, %6 : vector<8x32xf32>
    %c0_6 = arith.constant 0 : index
    %c0_7 = arith.constant 0 : index
    %8 = vector.load %arg4[%c0_6, %c0_7] : memref<32x32xf32, #tpu.memory_space<vmem>>, vector<32x32xf32>
    %cst_8 = arith.constant dense<0.000000e+00> : vector<8x32xf32>
    %9 = tpu.matmul %7, %8, %cst_8 {dimension_numbers = #tpu.dot_dimension_numbers<[1], [0], [0], [1], [0, 0, 1, 1], [], []>} : vector<8x32xf32>, vector<32x32xf32>, vector<8x32xf32> -> vector<8x32xf32>
    %c0_9 = arith.constant 0 : index
    %c0_10 = arith.constant 0 : index
    %10 = vector.load %arg5[%c0_9, %c0_10] : memref<1x32xf32, #tpu.memory_space<vmem>>, vector<1x32xf32>
    %11 = vector.broadcast %10 : vector<1x32xf32> to vector<8x32xf32>
    %12 = arith.addf %9, %11 : vector<8x32xf32>
    %cst_11 = arith.constant 0.000000e+00 : f32
    %13 = vector.broadcast %cst_11 : f32 to vector<8x32xf32>
    %14 = arith.maximumf %12, %13 : vector<8x32xf32>
    %c0_12 = arith.constant 0 : index
    %c0_13 = arith.constant 0 : index
    %15 = vector.load %arg6[%c0_12, %c0_13] : memref<32x128xf32, #tpu.memory_space<vmem>>, vector<32x128xf32>
    %cst_14 = arith.constant dense<0.000000e+00> : vector<8x128xf32>
    %16 = tpu.matmul %14, %15, %cst_14 {dimension_numbers = #tpu.dot_dimension_numbers<[1], [0], [0], [1], [0, 0, 1, 1], [], []>} : vector<8x32xf32>, vector<32x128xf32>, vector<8x128xf32> -> vector<8x128xf32>
    %c0_15 = arith.constant 0 : index
    %c0_16 = arith.constant 0 : index
    %17 = vector.load %arg7[%c0_15, %c0_16] : memref<1x128xf32, #tpu.memory_space<vmem>>, vector<1x128xf32>
    %18 = vector.broadcast %17 : vector<1x128xf32> to vector<8x128xf32>
    %19 = arith.addf %16, %18 : vector<8x128xf32>
    %20 = tpu.iota {dimensions = array<i32: 1>} : vector<8x128xi32>
    %cst_17 = arith.constant -2.000000e+01 : f32
    %cst_18 = arith.constant 2.000000e+00 : f32
    %21 = vector.broadcast %cst_17 : f32 to vector<8x128xf32>
    %22 = arith.maximumf %21, %19 : vector<8x128xf32>
    %23 = vector.broadcast %cst_18 : f32 to vector<8x128xf32>
    %24 = arith.minimumf %23, %22 : vector<8x128xf32>
    %c8_i32 = arith.constant 8 : i32
    %25 = vector.broadcast %c8_i32 : i32 to vector<8x128xi32>
    %26 = arith.cmpi sge, %20, %25 : vector<8x128xi32>
    %27 = arith.select %26, %24, %19 : vector<8x128xi1>, vector<8x128xf32>
    %c0_19 = arith.constant 0 : index
    %c0_20 = arith.constant 0 : index
    %28 = vector.load %arg8[%c0_19, %c0_20] : memref<8x128xf32, #tpu.memory_space<vmem>>, vector<8x128xf32>
    tpu.vector_store %arg8[%c0_19, %c0_20], %27 {strides = array<i32>} : memref<8x128xf32, #tpu.memory_space<vmem>>, vector<8x128xf32>,
    return
  }
  func.func @transform_0(%arg0: i32) -> (i32, i32) {
    %c0_i32 = arith.constant 0 : i32
    %c0_i32_0 = arith.constant 0 : i32
    return %arg0, %c0_i32 : i32, i32
  }
  func.func @transform_1(%arg0: i32) -> (i32, i32) {
    %c0_i32 = arith.constant 0 : i32
    %c0_i32_0 = arith.constant 0 : i32
    %c0_i32_1 = arith.constant 0 : i32
    return %c0_i32, %c0_i32_0 : i32, i32
  }
  func.func @transform_2(%arg0: i32) -> (i32, i32) {
    %c0_i32 = arith.constant 0 : i32
    %c0_i32_0 = arith.constant 0 : i32
    %c0_i32_1 = arith.constant 0 : i32
    return %c0_i32, %c0_i32_0 : i32, i32
  }
  func.func @transform_3(%arg0: i32) -> (i32, i32) {
    %c0_i32 = arith.constant 0 : i32
    %c0_i32_0 = arith.constant 0 : i32
    %c0_i32_1 = arith.constant 0 : i32
    return %c0_i32, %c0_i32_0 : i32, i32
  }
  func.func @transform_4(%arg0: i32) -> (i32, i32) {
    %c0_i32 = arith.constant 0 : i32
    %c0_i32_0 = arith.constant 0 : i32
    %c0_i32_1 = arith.constant 0 : i32
    return %c0_i32, %c0_i32_0 : i32, i32
  }
  func.func @transform_5(%arg0: i32) -> (i32, i32) {
    %c0_i32 = arith.constant 0 : i32
    %c0_i32_0 = arith.constant 0 : i32
    %c0_i32_1 = arith.constant 0 : i32
    return %c0_i32, %c0_i32_0 : i32, i32
  }
  func.func @transform_6(%arg0: i32) -> (i32, i32) {
    %c0_i32 = arith.constant 0 : i32
    %c0_i32_0 = arith.constant 0 : i32
    %c0_i32_1 = arith.constant 0 : i32
    return %c0_i32, %c0_i32_0 : i32, i32
  }
  func.func @transform_7(%arg0: i32) -> (i32, i32) {
    %c0_i32 = arith.constant 0 : i32
    %c0_i32_0 = arith.constant 0 : i32
    return %arg0, %c0_i32 : i32, i32
  }
}

</mosaic_0001>

<llo_original>
// kernel: actor_forward.1
$region0: #{actor_forward.1}
  #allocation0 [shape = 'u32[]', space=smem, size = 0x4, offset = 0x4, fixed_abs, tag = 'smem constant byte address 0x4 - core index']
  #allocation1 [shape = 'u32[144,128]{1,0:T(1,128)}', space=vmem, size = 0x12000, scoped, tag = 'internal scratch']
  %s0 = inlined_call_operand.vmem [shape: f32[8,16], index: 0, kind: input, shape index: {}]
  %s1 = inlined_call_operand.vmem [shape: f32[16,32], index: 1, kind: input, shape index: {}]
  %s2 = inlined_call_operand.vmem [shape: f32[1,32], index: 2, kind: input, shape index: {}]
  %s3 = inlined_call_operand.vmem [shape: f32[32,32], index: 3, kind: input, shape index: {}]
  %s4 = inlined_call_operand.vmem [shape: f32[1,32], index: 4, kind: input, shape index: {}]
  %s5 = inlined_call_operand.vmem [shape: f32[32,128], index: 5, kind: input, shape index: {}]
  %s6 = inlined_call_operand.vmem [shape: f32[1,128], index: 6, kind: input, shape index: {}]
  %s7 = inlined_call_operand.vmem [shape: f32[8,128], index: 7, kind: output, shape index: {}]
  %s8 = sld [smem:[#allocation0]]
  $region38: #{actor_forward.1} parent=0
    _
  %s10 = ssub.s32 1, %s8
  %s11 = scalar_select 0, %s10, %s8
  // Predicated region
  $region2: #{actor_forward.1} parent=0 // pred_check
    _
  $region3: #{actor_forward.1} parent=0 // pred_check_branch
    %13 = sbr.rel (0) target = $region5
  $region4: #{actor_forward.1} parent=0 // pred_region
    _
  $region5: #{actor_forward.1} parent=0 // pred_fallthru
    _
  // Predicated region
  $region6: #{actor_forward.1} parent=0 // pred_check
    _
  $region7: #{actor_forward.1} parent=0 // pred_check_branch
    %15 = sbr.rel (0) target = $region9
  $region8: #{actor_forward.1} parent=0 // pred_region
    _
  $region9: #{actor_forward.1} parent=0 // pred_fallthru
    _
  // Predicated region
  $region10: #{actor_forward.1} parent=0 // pred_check
    _
  $region11: #{actor_forward.1} parent=0 // pred_check_branch
    %17 = sbr.rel (0) target = $region13
  $region12: #{actor_forward.1} parent=0 // pred_region
    _
  $region13: #{actor_forward.1} parent=0 // pred_fallthru
    _
  // Predicated region
  $region14: #{actor_forward.1} parent=0 // pred_check
    _
  $region15: #{actor_forward.1} parent=0 // pred_check_branch
    %19 = sbr.rel (0) target = $region17
  $region16: #{actor_forward.1} parent=0 // pred_region
    _
  $region17: #{actor_forward.1} parent=0 // pred_fallthru
    _
  // Predicated region
  $region18: #{actor_forward.1} parent=0 // pred_check
    _
  $region19: #{actor_forward.1} parent=0 // pred_check_branch
    %21 = sbr.rel (0) target = $region21
  $region20: #{actor_forward.1} parent=0 // pred_region
    _
  $region21: #{actor_forward.1} parent=0 // pred_fallthru
    _
  // Predicated region
  $region22: #{actor_forward.1} parent=0 // pred_check
    _
  $region23: #{actor_forward.1} parent=0 // pred_check_branch
    %23 = sbr.rel (0) target = $region25
  $region24: #{actor_forward.1} parent=0 // pred_region
    _
  $region25: #{actor_forward.1} parent=0 // pred_fallthru
    _
  // Predicated region
  $region26: #{actor_forward.1} parent=0 // pred_check
    _
  $region27: #{actor_forward.1} parent=0 // pred_check_branch
    %25 = sbr.rel (0) target = $region29
  $region28: #{actor_forward.1} parent=0 // pred_region
    _
  $region29: #{actor_forward.1} parent=0 // pred_fallthru
    _
  %v26 = vld [vmem:[%s0] sm:$0xff]
  %v27 = vld [vmem:[%s1] sm:$0xff]
  %v28 = vld [vmem:[%s1 + $0x8] sm:$0xff]
  %v29 = vld [vmem:[%s2] sm:$0x1]
  %v31 = vlaneseq
  %v32 = vshrl.u32 %v31, 7
  %v33 = vsub.s32 0, %v32
  %v34 = vrot.slane %v29, %v33
  %vm36 = vcmask 130048
  %v38 = vsel %vm36, %v26, 0
  %40 = vmatprep.subr.mxu0 0.0
  %41 = vmatpush1.msra.mxu0 %v27
  %42 = vmatprep.subr.mxu0 0.0
  %43 = vmatpush1.msra.mxu0 %v28
  %44 = vmatprep.subr.mxu0 0.0
  %45 = vmatpush1.msra.mxu0 0.0
  %46 = vmatprep.subr.mxu0 0.0
  %47 = vmatpush1.msra.mxu0 0.0
  %48 = vmatprep.subr.mxu0 0.0
  %49 = vmatpush1.msra.mxu0 0.0
  %50 = vmatprep.subr.mxu0 0.0
  %51 = vmatpush1.msra.mxu0 0.0
  %52 = vmatprep.subr.mxu0 0.0
  %53 = vmatpush1.msra.mxu0 0.0
  %54 = vmatprep.subr.mxu0 0.0
  %55 = vmatpush1.msra.mxu0 0.0
  %56 = vmatprep.subr.mxu0 0.0
  %57 = vmatpush1.msra.mxu0 0.0
  %58 = vmatprep.subr.mxu0 0.0
  %59 = vmatpush1.msra.mxu0 0.0
  %60 = vmatprep.subr.mxu0 0.0
  %61 = vmatpush1.msra.mxu0 0.0
  %62 = vmatprep.subr.mxu0 0.0
  %63 = vmatpush1.msra.mxu0 0.0
  %64 = vmatprep.subr.mxu0 0.0
  %65 = vmatpush1.msra.mxu0 0.0
  %66 = vmatprep.subr.mxu0 0.0
  %67 = vmatpush1.msra.mxu0 0.0
  %68 = vmatprep.subr.mxu0 0.0
  %69 = vmatpush1.msra.mxu0 0.0
  %70 = vmatprep.subr.mxu0 0.0
  %71 = vmatpush1.msra.mxu0 0.0
  %72 = vmatprep.subr.mxu0 0.0
  %73 = vmatpush1.msra.mxu0 0.0
  %74 = vmatprep.subr.mxu0 0.0
  %75 = vmatpush1.msra.mxu0 0.0
  %76 = vmatprep.subr.mxu0 0.0
  %77 = vmatpush1.msra.mxu0 0.0
  %78 = vmatprep.subr.mxu0 0.0
  %79 = vmatpush1.msra.mxu0 0.0
  %80 = vmatprep.subr.mxu0 0.0
  %81 = vmatpush1.msra.mxu0 0.0
  %82 = vmatprep.subr.mxu0 0.0
  %83 = vmatpush1.msra.mxu0 0.0
  %84 = vmatprep.subr.mxu0 0.0
  %85 = vmatpush1.msra.mxu0 0.0
  %86 = vmatprep.subr.mxu0 0.0
  %87 = vmatpush1.msra.mxu0 0.0
  %88 = vmatprep.subr.mxu0 0.0
  %89 = vmatpush1.msra.mxu0 0.0
  %90 = vmatprep.subr.mxu0 0.0
  %91 = vmatpush1.msra.mxu0 0.0
  %92 = vmatprep.subr.mxu0 0.0
  %93 = vmatpush1.msra.mxu0 0.0
  %94 = vmatprep.subr.mxu0 0.0
  %95 = vmatpush1.msra.mxu0 0.0
  %96 = vmatprep.subr.mxu0 0.0
  %97 = vmatpush1.msra.mxu0 0.0
  %98 = vmatprep.subr.mxu0 0.0
  %99 = vmatpush1.msra.mxu0 0.0
  %100 = vmatprep.subr.mxu0 0.0
  %101 = vmatpush1.msra.mxu0 0.0
  %102 = vmatprep.subr.mxu0 0.0
  %103 = vmatpush1.msra.mxu0 0.0
  %104 = vmatprep.mubr.f32.mxu0 0.0
  %105 = vmatmul.mubr.f32.gmra.mrb[0].mxu0 %v38
  %v106 = vpop.f32.mrb[0].mxu0
  %v107 = vadd.f32 %v34, %v106
  %v108 = vpop.f32.mrb[0].mxu0
  %109 = vdwg.mxu0
  %v110 = vmax.f32 %v107, 0.0
  %v111 = vld [vmem:[%s3] sm:$0xff]
  %v112 = vld [vmem:[%s3 + $0x8] sm:$0xff]
  %v113 = vld [vmem:[%s3 + $0x10] sm:$0xff]
  %v114 = vld [vmem:[%s3 + $0x18] sm:$0xff]
  %v115 = vld [vmem:[%s4] sm:$0x1]
  %v117 = vlaneseq
  %v118 = vshrl.u32 %v117, 7
  %v119 = vsub.s32 0, %v118
  %v120 = vrot.slane %v115, %v119
  %vm122 = vcmask 261120
  %v124 = vsel %vm122, %v110, 0
  %126 = vmatprep.subr.mxu0 0.0
  %127 = vmatpush1.msra.mxu0 %v111
  %128 = vmatprep.subr.mxu0 0.0
  %129 = vmatpush1.msra.mxu0 %v112
  %130 = vmatprep.subr.mxu0 0.0
  %131 = vmatpush1.msra.mxu0 %v113
  %132 = vmatprep.subr.mxu0 0.0
  %133 = vmatpush1.msra.mxu0 %v114
  %134 = vmatprep.subr.mxu0 0.0
  %135 = vmatpush1.msra.mxu0 0.0
  %136 = vmatprep.subr.mxu0 0.0
  %137 = vmatpush1.msra.mxu0 0.0
  %138 = vmatprep.subr.mxu0 0.0
  %139 = vmatpush1.msra.mxu0 0.0
  %140 = vmatprep.subr.mxu0 0.0
  %141 = vmatpush1.msra.mxu0 0.0
  %142 = vmatprep.subr.mxu0 0.0
  %143 = vmatpush1.msra.mxu0 0.0
  %144 = vmatprep.subr.mxu0 0.0
  %145 = vmatpush1.msra.mxu0 0.0
  %146 = vmatprep.subr.mxu0 0.0
  %147 = vmatpush1.msra.mxu0 0.0
  %148 = vmatprep.subr.mxu0 0.0
  %149 = vmatpush1.msra.mxu0 0.0
  %150 = vmatprep.subr.mxu0 0.0
  %151 = vmatpush1.msra.mxu0 0.0
  %152 = vmatprep.subr.mxu0 0.0
  %153 = vmatpush1.msra.mxu0 0.0
  %154 = vmatprep.subr.mxu0 0.0
  %155 = vmatpush1.msra.mxu0 0.0
  %156 = vmatprep.subr.mxu0 0.0
  %157 = vmatpush1.msra.mxu0 0.0
  %158 = vmatprep.subr.mxu0 0.0
  %159 = vmatpush1.msra.mxu0 0.0
  %160 = vmatprep.subr.mxu0 0.0
  %161 = vmatpush1.msra.mxu0 0.0
  %162 = vmatprep.subr.mxu0 0.0
  %163 = vmatpush1.msra.mxu0 0.0
  %164 = vmatprep.subr.mxu0 0.0
  %165 = vmatpush1.msra.mxu0 0.0
  %166 = vmatprep.subr.mxu0 0.0
  %167 = vmatpush1.msra.mxu0 0.0
  %168 = vmatprep.subr.mxu0 0.0
  %169 = vmatpush1.msra.mxu0 0.0
  %170 = vmatprep.subr.mxu0 0.0
  %171 = vmatpush1.msra.mxu0 0.0
  %172 = vmatprep.subr.mxu0 0.0
  %173 = vmatpush1.msra.mxu0 0.0
  %174 = vmatprep.subr.mxu0 0.0
  %175 = vmatpush1.msra.mxu0 0.0
  %176 = vmatprep.subr.mxu0 0.0
  %177 = vmatpush1.msra.mxu0 0.0
  %178 = vmatprep.subr.mxu0 0.0
  %179 = vmatpush1.msra.mxu0 0.0
  %180 = vmatprep.subr.mxu0 0.0
  %181 = vmatpush1.msra.mxu0 0.0
  %182 = vmatprep.subr.mxu0 0.0
  %183 = vmatpush1.msra.mxu0 0.0
  %184 = vmatprep.subr.mxu0 0.0
  %185 = vmatpush1.msra.mxu0 0.0
  %186 = vmatprep.subr.mxu0 0.0
  %187 = vmatpush1.msra.mxu0 0.0
  %188 = vmatprep.subr.mxu0 0.0
  %189 = vmatpush1.msra.mxu0 0.0
  %190 = vmatprep.mubr.f32.mxu0 0.0
  %191 = vmatmul.mubr.f32.gmra.mrb[0].mxu0 %v124
  %v192 = vpop.f32.mrb[0].mxu0
  %v193 = vadd.f32 %v120, %v192
  %v194 = vpop.f32.mrb[0].mxu0
  %195 = vdwg.mxu0
  %v196 = vmax.f32 %v193, 0.0
  %v197 = vld [vmem:[%s5] sm:$0xff]
  %v198 = vld [vmem:[%s5 + $0x8] sm:$0xff]
  %v199 = vld [vmem:[%s5 + $0x10] sm:$0xff]
  %v200 = vld [vmem:[%s5 + $0x18] sm:$0xff]
  %v201 = vld [vmem:[%s6] sm:$0x1]
  %v203 = vlaneseq
  %v204 = vshrl.u32 %v203, 7
  %v205 = vsub.s32 0, %v204
  %v206 = vrot.slane %v201, %v205
  %v209 = vsel %vm122, %v196, 0
  %211 = vmatprep.subr.mxu0 0.0
  %212 = vmatpush1.msra.mxu0 %v197
  %213 = vmatprep.subr.mxu0 0.0
  %214 = vmatpush1.msra.mxu0 %v198
  %215 = vmatprep.subr.mxu0 0.0
  %216 = vmatpush1.msra.mxu0 %v199
  %217 = vmatprep.subr.mxu0 0.0
  %218 = vmatpush1.msra.mxu0 %v200
  %219 = vmatprep.subr.mxu0 0.0
  %220 = vmatpush1.msra.mxu0 0.0
  %221 = vmatprep.subr.mxu0 0.0
  %222 = vmatpush1.msra.mxu0 0.0
  %223 = vmatprep.subr.mxu0 0.0
  %224 = vmatpush1.msra.mxu0 0.0
  %225 = vmatprep.subr.mxu0 0.0
  %226 = vmatpush1.msra.mxu0 0.0
  %227 = vmatprep.subr.mxu0 0.0
  %228 = vmatpush1.msra.mxu0 0.0
  %229 = vmatprep.subr.mxu0 0.0
  %230 = vmatpush1.msra.mxu0 0.0
  %231 = vmatprep.subr.mxu0 0.0
  %232 = vmatpush1.msra.mxu0 0.0
  %233 = vmatprep.subr.mxu0 0.0
  %234 = vmatpush1.msra.mxu0 0.0
  %235 = vmatprep.subr.mxu0 0.0
  %236 = vmatpush1.msra.mxu0 0.0
  %237 = vmatprep.subr.mxu0 0.0
  %238 = vmatpush1.msra.mxu0 0.0
  %239 = vmatprep.subr.mxu0 0.0
  %240 = vmatpush1.msra.mxu0 0.0
  %241 = vmatprep.subr.mxu0 0.0
  %242 = vmatpush1.msra.mxu0 0.0
  %243 = vmatprep.subr.mxu0 0.0
  %244 = vmatpush1.msra.mxu0 0.0
  %245 = vmatprep.subr.mxu0 0.0
  %246 = vmatpush1.msra.mxu0 0.0
  %247 = vmatprep.subr.mxu0 0.0
  %248 = vmatpush1.msra.mxu0 0.0
  %249 = vmatprep.subr.mxu0 0.0
  %250 = vmatpush1.msra.mxu0 0.0
  %251 = vmatprep.subr.mxu0 0.0
  %252 = vmatpush1.msra.mxu0 0.0
  %253 = vmatprep.subr.mxu0 0.0
  %254 = vmatpush1.msra.mxu0 0.0
  %255 = vmatprep.subr.mxu0 0.0
  %256 = vmatpush1.msra.mxu0 0.0
  %257 = vmatprep.subr.mxu0 0.0
  %258 = vmatpush1.msra.mxu0 0.0
  %259 = vmatprep.subr.mxu0 0.0
  %260 = vmatpush1.msra.mxu0 0.0
  %261 = vmatprep.subr.mxu0 0.0
  %262 = vmatpush1.msra.mxu0 0.0
  %263 = vmatprep.subr.mxu0 0.0
  %264 = vmatpush1.msra.mxu0 0.0
  %265 = vmatprep.subr.mxu0 0.0
  %266 = vmatpush1.msra.mxu0 0.0
  %267 = vmatprep.subr.mxu0 0.0
  %268 = vmatpush1.msra.mxu0 0.0
  %269 = vmatprep.subr.mxu0 0.0
  %270 = vmatpush1.msra.mxu0 0.0
  %271 = vmatprep.subr.mxu0 0.0
  %272 = vmatpush1.msra.mxu0 0.0
  %273 = vmatprep.subr.mxu0 0.0
  %274 = vmatpush1.msra.mxu0 0.0
  %275 = vmatprep.mubr.f32.mxu0 0.0
  %276 = vmatmul.mubr.f32.gmra.mrb[0].mxu0 %v209
  %v277 = vpop.f32.mrb[0].mxu0
  %v278 = vadd.f32 %v206, %v277
  %v279 = vpop.f32.mrb[0].mxu0
  %280 = vdwg.mxu0
  %v281 = vlaneseq
  %v282 = vand.u32 %v281, 127
  %v283 = vmax.f32 %v278, -20.0
  %v284 = vmin.f32 %v283, 2.0
  %vm285 = vcmp.ge.s32.totalorder %v282, 8
  %v286 = vsel %vm285, %v284, %v278
  %287 = vst [vmem:[%s7] sm:$0xff] %v286
  // Predicated region
  $region30: #{actor_forward.1} parent=0 // pred_check
    _
  $region31: #{actor_forward.1} parent=0 // pred_check_branch
    %289 = sbr.rel (0) target = $region33
  $region32: #{actor_forward.1} parent=0 // pred_region
    _
  $region33: #{actor_forward.1} parent=0 // pred_fallthru
    _
  // Predicated region
  $region34: #{actor_forward.1} parent=0 // pred_check
    _
  $region35: #{actor_forward.1} parent=0 // pred_check_branch
    %291 = sbr.rel (0) target = $region37
  $region36: #{actor_forward.1} parent=0 // pred_region
    _
  $region37: #{actor_forward.1} parent=0 // pred_fallthru
    _

</llo_original>
